<compile_context>
chip_gen: v6e
topology: v6e:2x2x1
jax: 0.10.0
libtpu: 0.0.40
codegen_flags: <defaults>
</compile_context>

<pallas_src>
import math

import jax
import jax.numpy as jnp
from jax.experimental import pallas as pl
from jax.experimental.pallas import tpu as pltpu


_SQRT_2_OVER_PI = math.sqrt(2.0 / math.pi)

# Candidate lane widths (all multiples of 128), largest first.
_LANE_CANDIDATES = (4096, 2048, 1024, 512, 384, 256, 128)


def _gelu_kernel(x_ref, o_ref):
    x = x_ref[...].astype(jnp.float32)
    inner = _SQRT_2_OVER_PI * (x + 0.044715 * (x * x * x))
    o_ref[...] = (0.5 * x * (1.0 + jnp.tanh(inner))).astype(o_ref.dtype)


def gelu(x, *, target_block_bytes=2 * 1024 * 1024):
    """Tanh-approx GELU, elementwise, any shape / float dtype."""
    orig_shape = x.shape
    orig_dtype = x.dtype
    n = int(x.size)
    if n == 0:
        return x

    itemsize = jnp.dtype(orig_dtype).itemsize
    # Sublane packing granularity: f32 -> 8, bf16/f16 -> 16, 1-byte -> 32.
    sublane = {4: 8, 2: 16, 1: 32}.get(itemsize, 8)

    flat = x.reshape(-1)

    # Pick a lane width that exactly divides the element count so no padding
    # (and no output slice) is needed.  Fallback: pad the flat tail to 128.
    lane = None
    for c in _LANE_CANDIDATES:
        if n % c == 0:
            lane = c
            break
    padded = lane is None
    if padded:
        lane = 128
        n_total = pl.cdiv(n, lane) * lane
        flat = jnp.pad(flat, (0, n_total - n))
    else:
        n_total = n

    rows = n_total // lane

    # Rows per block: ~target_block_bytes worth, rounded to sublane packing.
    tr_target = max(1, target_block_bytes // (lane * itemsize))
    tr_target = max(sublane, (tr_target // sublane) * sublane)

    if rows <= sublane:
        # Single block spanning the full row dim (legal even if < sublane).
        tr = rows
    else:
        # Keep at least 2 blocks along the parallel axis so both v7x
        # TensorCores get work; on v5e/v6e the extra grid step is negligible.
        half_rows = -(-rows // 2)
        half_rows = -(-half_rows // sublane) * sublane
        tr = min(tr_target, half_rows)

    grid = (pl.cdiv(rows, tr),)

    out = pl.pallas_call(
        _gelu_kernel,
        out_shape=jax.ShapeDtypeStruct((rows, lane), orig_dtype),
        grid_spec=pltpu.PrefetchScalarGridSpec(
            num_scalar_prefetch=0,
            grid=grid,
            in_specs=[pl.BlockSpec((tr, lane), lambda i: (i, 0))],
            out_specs=pl.BlockSpec((tr, lane), lambda i: (i, 0)),
        ),
        compiler_params=pltpu.CompilerParams(
            dimension_semantics=("parallel",),
        ),
    )(flat.reshape(rows, lane))

    out = out.reshape(-1)
    if padded:
        out = out[:n]
    return out.reshape(orig_shape)


def _gelu_ref(x):
    xf = x.astype(jnp.float32)
    y = 0.5 * xf * (1.0 + jnp.tanh(_SQRT_2_OVER_PI * (xf + 0.044715 * xf ** 3)))
    return y.astype(x.dtype)


if __name__ == "__main__":
    key = jax.random.PRNGKey(0)

    # Primary example consistent with a feed-forward block: (batch, seq, hidden).
    x = jax.random.normal(key, (2, 8, 32), dtype=jnp.float32)
    y = gelu(x)
    jax.block_until_ready(y)
    y_ref = _gelu_ref(x)
    assert y.shape == x.shape and y.dtype == x.dtype
    assert jnp.allclose(y, y_ref, atol=1e-5, rtol=1e-5)

    k1, k2, k3 = jax.random.split(key, 3)

    # Multi-block path (grid > 1, lane-dense slab), f32.
    x2 = jax.random.normal(k1, (4, 128, 384), dtype=jnp.float32)
    y2 = gelu(x2)
    jax.block_until_ready(y2)
    assert jnp.allclose(y2, _gelu_ref(x2), atol=1e-5, rtol=1e-5)

    # bf16 path (16-row sublane packing).
    x3 = jax.random.normal(k2, (2, 64, 256), dtype=jnp.bfloat16)
    y3 = gelu(x3)
    jax.block_until_ready(y3)
    assert y3.dtype == jnp.bfloat16
    assert jnp.allclose(y3.astype(jnp.float32),
                        _gelu_ref(x3).astype(jnp.float32), atol=2e-2, rtol=2e-2)

    # Unaligned total-size fallback path (pad + slice of the flat tail).
    x4 = jax.random.normal(k3, (3, 5, 7), dtype=jnp.float32)
    y4 = gelu(x4)
    jax.block_until_ready(y4)
    assert jnp.allclose(y4, _gelu_ref(x4), atol=1e-5, rtol=1e-5)

    print("KERNEL_OK")
</pallas_src>

<mosaic_0001>
module attributes {stable_mosaic.version = 11 : i64} {
  func.func @_gelu_kernel(%arg0: i32, %arg1: memref<1x512xf32, #tpu.memory_space<vmem>>, %arg2: memref<1x512xf32, #tpu.memory_space<vmem>>) attributes {dimension_semantics = [#tpu.dimension_semantics<parallel>], iteration_bounds = array<i64: 1>, scalar_prefetch = 0 : i64, scratch_operands = 0 : i64, tpu.core_type = #tpu.core_type<tc>, window_params = [{transform_indices = @transform_0, window_bounds = array<i64: 1, 512>}, {transform_indices = @transform_1, window_bounds = array<i64: 1, 512>}]} {
    %c0 = arith.constant 0 : index
    %c0_0 = arith.constant 0 : index
    %0 = vector.load %arg1[%c0, %c0_0] : memref<1x512xf32, #tpu.memory_space<vmem>>, vector<1x512xf32>
    %1 = arith.mulf %0, %0 : vector<1x512xf32>
    %2 = arith.mulf %1, %0 : vector<1x512xf32>
    %cst = arith.constant 4.471500e-02 : f32
    %3 = vector.broadcast %cst : f32 to vector<1x512xf32>
    %4 = arith.mulf %3, %2 : vector<1x512xf32>
    %5 = arith.addf %0, %4 : vector<1x512xf32>
    %cst_1 = arith.constant 0.797884583 : f32
    %6 = vector.broadcast %cst_1 : f32 to vector<1x512xf32>
    %7 = arith.mulf %6, %5 : vector<1x512xf32>
    %cst_2 = arith.constant 5.000000e-01 : f32
    %8 = vector.broadcast %cst_2 : f32 to vector<1x512xf32>
    %9 = arith.mulf %8, %0 : vector<1x512xf32>
    %10 = math.tanh %7 : vector<1x512xf32>
    %cst_3 = arith.constant 1.000000e+00 : f32
    %11 = vector.broadcast %cst_3 : f32 to vector<1x512xf32>
    %12 = arith.addf %11, %10 : vector<1x512xf32>
    %13 = arith.mulf %9, %12 : vector<1x512xf32>
    %c0_4 = arith.constant 0 : index
    %c0_5 = arith.constant 0 : index
    %14 = vector.load %arg2[%c0_4, %c0_5] : memref<1x512xf32, #tpu.memory_space<vmem>>, vector<1x512xf32>
    tpu.vector_store %arg2[%c0_4, %c0_5], %13 {strides = array<i32>} : memref<1x512xf32, #tpu.memory_space<vmem>>, vector<1x512xf32>,
    return
  }
  func.func @transform_0(%arg0: i32) -> (i32, i32) {
    %c0_i32 = arith.constant 0 : i32
    %c0_i32_0 = arith.constant 0 : i32
    return %arg0, %c0_i32 : i32, i32
  }
  func.func @transform_1(%arg0: i32) -> (i32, i32) {
    %c0_i32 = arith.constant 0 : i32
    %c0_i32_0 = arith.constant 0 : i32
    return %arg0, %c0_i32 : i32, i32
  }
}

</mosaic_0001>

<llo_original>
// kernel: tpu_custom_call.1
$region0: #{tpu_custom_call.1}
  #allocation0 [shape = 'u32[]', space=smem, size = 0x4, offset = 0x4, fixed_abs, tag = 'smem constant byte address 0x4 - core index']
  #allocation1 [shape = 'u32[144,128]{1,0:T(1,128)}', space=vmem, size = 0x12000, scoped, tag = 'internal scratch']
  %s0 = inlined_call_operand.hbm [shape: f32[1,512], index: 0, kind: input, shape index: {}]
  %s1 = inlined_call_operand.hbm [shape: f32[1,512], index: 1, kind: output, shape index: {}]
  %s2 = sld [smem:[#allocation0]]
  $region18: #{tpu_custom_call.1} parent=0
    _
  %s4 = ssub.s32 1, %s2
  %s5 = scalar_select 0, %s4, %s2
  $region1: #{tpu_custom_call.1} parent=0
    #allocation2 [shape = 'u8[2048]{0}', space=vmem, size = 0x800, scoped, tag = 'input window, operand 0, single buffered']
    #allocation3 [shape = 's32[1]{0}', space=sflag, size = 0x4, scoped, tag = 'scoped memory for tpu_custom_call.1']
    #allocation4 [shape = 's32[1]{0}', space=sflag, size = 0x4, scoped, tag = 'scoped memory for tpu_custom_call.1']
    #allocation5 [shape = 'u8[2048]{0}', space=vmem, size = 0x800, scoped, tag = 'output window, operand 0, single buffered']
    %6 = vsyncpa [#allocation3], 0
    %7 = vsyncpa [#allocation4], 0
    // Predicated region
    $region2: #{tpu_custom_call.1} parent=1 // pred_check
      _
    $region3: #{tpu_custom_call.1} parent=1 // pred_check_branch
      %9 = sbr.rel (0) target = $region5
    $region4: #{tpu_custom_call.1} parent=1 // pred_region
      %s11 = ssub.s32 64, 64
      %12 = vsyncadd [#allocation3], %s11
      %s14 = sshll.u32 [#allocation2], 4
      %s15 = int_to_ptr.vmem [resolvable:$true] %s14
      %17 = dma.hbm_to_vmem [thread:$0]  %s0, 64, %s15, [#allocation3]
    $region5: #{tpu_custom_call.1} parent=1 // pred_fallthru
      _
    // Predicated region
    $region6: #{tpu_custom_call.1} parent=1 // pred_check
      _
    $region7: #{tpu_custom_call.1} parent=1 // pred_check_branch
      %19 = sbr.rel (0) target = $region9
    $region8: #{tpu_custom_call.1} parent=1 // pred_region
      %20 = dma.done [#allocation3], 64
    $region9: #{tpu_custom_call.1} parent=1 // pred_fallthru
      _
    %v21 = vld [vmem:[#allocation2] sm:$0xf]
    %v22 = vmul.f32 %v21, %v21
    %v23 = vmul.f32 %v22, %v21
    %v24 = vmul.f32 %v23, 0.044715
    %v25 = vadd.f32 %v21, %v24
    %v26 = vmul.f32 %v25, 0.7978846
    %v27 = vmul.f32 %v21, 0.5
    %v28 = vtanh.pop %v26
    %v29 = vadd.f32 %v28, 1.0
    %v30 = vmul.f32 %v27, %v29
    %v31 = vlaneseq
    %vm32 = vcmp.ge.s32.totalorder %v31, 0
    %vm33 = vcmp.lt.s32.totalorder %v31, 512
    %vm34 = vmand %vm32, %vm33
    %35 = vst.msk [vmem:[#allocation5] sm:$0xf] %vm34, %v30
    // Predicated region
    $region10: #{tpu_custom_call.1} parent=1 // pred_check
      _
    $region11: #{tpu_custom_call.1} parent=1 // pred_check_branch
      %37 = sbr.rel (0) target = $region13
    $region12: #{tpu_custom_call.1} parent=1 // pred_region
      %s39 = ssub.s32 64, 64
      %40 = vsyncadd [#allocation4], %s39
      %s42 = sshll.u32 [#allocation5], 4
      %s43 = int_to_ptr.vmem [resolvable:$true] %s42
      %45 = dma.vmem_to_hbm [thread:$0]  %s43, 64, %s1, [#allocation4]
    $region13: #{tpu_custom_call.1} parent=1 // pred_fallthru
      _
    // Predicated region
    $region14: #{tpu_custom_call.1} parent=1 // pred_check
      _
    $region15: #{tpu_custom_call.1} parent=1 // pred_check_branch
      %47 = sbr.rel (0) target = $region17
    $region16: #{tpu_custom_call.1} parent=1 // pred_region
      %48 = dma.done [#allocation4], 64
    $region17: #{tpu_custom_call.1} parent=1 // pred_fallthru
      _
    %49 = vsyncpa [#allocation3], 1
    %50 = vsyncpa [#allocation4], 1

</llo_original>
